<compile_context>
chip_gen: v7x
topology: tpu7x:2x2x1
jax: 0.10.0
libtpu: 0.0.40
codegen_flags: <defaults>
</compile_context>

<pallas_src>
import math
import functools

import numpy as np
import jax
import jax.numpy as jnp
from jax.experimental import pallas as pl
from jax.experimental.pallas import tpu as pltpu

IGNORE_LB = 255


def _ohem_ce_kernel(logits_ref, labels_ref, loss_ref, stats_ref, *, thresh, hw, tp):
    """Per-pixel CE loss + per-block OHEM partial statistics.

    logits_ref: (C, TP) f32     labels_ref: (1, TP) i32
    loss_ref:   (1, TP) f32     stats_ref:  (8, 128) f32
        stats[0,0] = # valid (non-ignored, in-range) pixels in this block
        stats[1,0] = # pixels with loss > thresh
        stats[2,0] = sum of losses > thresh
        (everything else zero)
    """
    j = pl.program_id(1)

    x = logits_ref[...].astype(jnp.float32)                 # (C, TP)
    lbl = labels_ref[...]                                    # (1, TP) int32

    # Mask the ragged last tile (reads past H*W are unspecified garbage).
    lane = jax.lax.broadcasted_iota(jnp.int32, lbl.shape, 1)  # (1, TP)
    in_range = (j * tp + lane) < hw
    valid = (lbl != IGNORE_LB) & in_range                     # (1, TP)
    safe_lbl = jnp.where(valid, lbl, 0)

    # Numerically stable log-sum-exp over the class (sublane) axis.
    m = jnp.max(x, axis=0, keepdims=True)                                  # (1, TP)
    lse = m + jnp.log(jnp.sum(jnp.exp(x - m), axis=0, keepdims=True))      # (1, TP)

    # Gather the logit at the label class via one-hot select (no dyn. gather).
    c_iota = jax.lax.broadcasted_iota(jnp.int32, x.shape, 0)               # (C, TP)
    picked = jnp.sum(jnp.where(c_iota == safe_lbl, x, 0.0),
                     axis=0, keepdims=True)                                # (1, TP)

    loss = jnp.where(valid, lse - picked, 0.0)                             # (1, TP)
    loss_ref[...] = loss

    hard = loss > thresh
    n_valid = jnp.sum(valid.astype(jnp.float32))     # exact: block has <= tp pixels
    n_hard = jnp.sum(hard.astype(jnp.float32))
    s_hard = jnp.sum(jnp.where(hard, loss, 0.0))

    row = jax.lax.broadcasted_iota(jnp.int32, stats_ref.shape, 0)          # (8, 128)
    col = jax.lax.broadcasted_iota(jnp.int32, stats_ref.shape, 1)
    at0 = col == 0
    stats_ref[...] = jnp.where(at0 & (row == 0), n_valid,
                       jnp.where(at0 & (row == 1), n_hard,
                         jnp.where(at0 & (row == 2), s_hard, 0.0)))


def _pick_tp(num_classes, hw):
    """Pixel-tile size: fill a healthy chunk of VMEM with double-buffered blocks.

    The budget assumes worst-case sublane padding: the (1, tp) label / loss
    blocks may occupy 8 sublanes and the (C, tp) logits block rounds C up to 8.
    2 * 4B * (C_pad + 8 + 8) * tp <= ~12 MiB keeps it safe on v5e (16 MiB
    default scoped VMEM, raised below), v6e (128 MiB) and v7x (64 MiB physical).
    """
    c_pad = ((num_classes + 7) // 8) * 8
    budget = 12 * 1024 * 1024
    tp = budget // (8 * (c_pad + 16))
    tp = max(128, (tp // 128) * 128)
    tp = min(tp, ((hw + 127) // 128) * 128)   # never bigger than one image plane
    return tp


def ohem_ce_loss(logits, labels, thresh_p=0.7, tp=None):
    """Equivalent of OhemCELoss(thresh_p, ignore_lb=255)(logits, labels).

    logits: (N, C, H, W) float32 (NCHW, as in PyTorch)
    labels: (N, H, W)    int32   (class ids, 255 = ignore)
    """
    N, C, H, W = logits.shape
    HW = H * W
    P = N * HW
    thresh = float(-math.log(thresh_p))

    # Free layout changes only: no transpose, no padding copy.
    x = logits.reshape(N, C, HW).astype(jnp.float32)
    lbl = labels.reshape(N, 1, HW).astype(jnp.int32)

    if tp is None:
        tp = _pick_tp(C, HW)
    tp = max(128, (min(tp, ((HW + 127) // 128) * 128) // 128) * 128)
    J = pl.cdiv(HW, tp)

    loss_out, stats = pl.pallas_call(
        functools.partial(_ohem_ce_kernel, thresh=thresh, hw=HW, tp=tp),
        out_shape=(
            jax.ShapeDtypeStruct((N, 1, HW), jnp.float32),
            jax.ShapeDtypeStruct((N, J, 8, 128), jnp.float32),
        ),
        grid=(N, J),
        in_specs=[
            pl.BlockSpec((pl.Squeezed(), C, tp), lambda n, j: (n, 0, j)),
            pl.BlockSpec((pl.Squeezed(), 1, tp), lambda n, j: (n, 0, j)),
        ],
        out_specs=(
            pl.BlockSpec((pl.Squeezed(), 1, tp), lambda n, j: (n, 0, j)),
            pl.BlockSpec((pl.Squeezed(), pl.Squeezed(), 8, 128),
                         lambda n, j: (n, j, 0, 0)),
        ),
        compiler_params=pltpu.CompilerParams(
            dimension_semantics=("parallel", "parallel"),
            vmem_limit_bytes=32 * 1024 * 1024,
        ),
    )(x, lbl)

    # Per-block partials are exact in f32 (<= tp each); sum counts in int32 so
    # they stay exact above 2^24 total pixels.
    valid_count = jnp.sum(stats[:, :, 0, 0].astype(jnp.int32))
    hard_count = jnp.sum(stats[:, :, 1, 0].astype(jnp.int32))
    hard_sum = jnp.sum(stats[:, :, 2, 0])

    n_min = valid_count // 16                     # data-dependent, as in the spec's forward()
    loss_flat = loss_out.reshape(-1)              # (P,) per-pixel CE, 0 at ignored pixels
    k_max = max(P // 16, 1)                       # static upper bound on n_min

    def hard_path(_):
        # 0/0 -> NaN matches torch.mean of an empty tensor.
        return hard_sum / hard_count.astype(jnp.float32)

    def topk_path(_):
        # Fallback: mean of the top-n_min losses. Bounded top_k instead of a
        # full sort; only executed when actually needed (lax.cond).
        top_vals = jax.lax.top_k(loss_flat, k_max)[0]
        csum = jnp.cumsum(top_vals)
        k = jnp.clip(n_min, 1, k_max)
        return jnp.take(csum, k - 1) / k.astype(jnp.float32)

    return jax.lax.cond(hard_count >= n_min, hard_path, topk_path, None)


def _reference(logits, labels, thresh_p, ignore=IGNORE_LB):
    """Pure numpy re-implementation of the PyTorch forward (float32)."""
    N, C, H, W = logits.shape
    x = logits.transpose(0, 2, 3, 1).reshape(-1, C).astype(np.float32)
    lbl = labels.reshape(-1)
    valid = lbl != ignore
    m = x.max(axis=-1, keepdims=True)
    lse = (m + np.log(np.exp(x - m).sum(axis=-1, keepdims=True)))[:, 0]
    picked = x[np.arange(x.shape[0]), np.where(valid, lbl, 0)]
    loss = np.where(valid, lse - picked, 0.0).astype(np.float32)
    thresh = np.float32(-np.log(thresh_p))
    n_min = int(valid.sum()) // 16
    hard = loss[loss > thresh]
    if hard.size < n_min:
        hard = np.sort(loss)[::-1][:n_min]
    return float(hard.mean())


if __name__ == "__main__":
    key = jax.random.PRNGKey(0)
    k1, k2, k3 = jax.random.split(key, 3)

    N, C, H, W = 2, 4, 16, 16
    logits = jax.random.normal(k1, (N, C, H, W), dtype=jnp.float32)
    labels = jax.random.randint(k2, (N, H, W), 0, C, dtype=jnp.int32)
    # sprinkle some ignored pixels (label 255)
    ignore_mask = jax.random.uniform(k3, (N, H, W)) < 0.1
    labels = jnp.where(ignore_mask, IGNORE_LB, labels)

    out = ohem_ce_loss(logits, labels, thresh_p=0.7)
    out = jax.block_until_ready(out)

    ref = _reference(np.asarray(logits), np.asarray(labels), 0.7)
    assert np.allclose(float(out), ref, rtol=1e-4, atol=1e-5), (float(out), ref)

    print("KERNEL_OK")
</pallas_src>

<mosaic_0001>
module attributes {stable_mosaic.version = 11 : i64} {
  func.func @_ohem_ce_kernel(%arg0: i32, %arg1: i32, %arg2: memref<1x4x256xf32, #tpu.memory_space<vmem>>, %arg3: memref<1x1x256xi32, #tpu.memory_space<vmem>>, %arg4: memref<1x1x256xf32, #tpu.memory_space<vmem>>, %arg5: memref<1x1x8x128xf32, #tpu.memory_space<vmem>>) attributes {dimension_semantics = [#tpu.dimension_semantics<parallel>, #tpu.dimension_semantics<parallel>], iteration_bounds = array<i64: 2, 1>, scalar_prefetch = 0 : i64, scratch_operands = 0 : i64, tpu.core_type = #tpu.core_type<tc>, window_params = [{transform_indices = @transform_0, window_bounds = array<i64: 1, 4, 256>}, {transform_indices = @transform_1, window_bounds = array<i64: 1, 1, 256>}, {transform_indices = @transform_2, window_bounds = array<i64: 1, 1, 256>}, {transform_indices = @transform_3, window_bounds = array<i64: 1, 1, 8, 128>}]} {
    %c0 = arith.constant 0 : index
    %c0_0 = arith.constant 0 : index
    %c0_1 = arith.constant 0 : index
    %0 = vector.load %arg2[%c0, %c0_0, %c0_1] : memref<1x4x256xf32, #tpu.memory_space<vmem>>, vector<1x4x256xf32>
    %1 = vector.shape_cast %0 : vector<1x4x256xf32> to vector<4x256xf32>
    %c0_2 = arith.constant 0 : index
    %c0_3 = arith.constant 0 : index
    %c0_4 = arith.constant 0 : index
    %2 = vector.load %arg3[%c0_2, %c0_3, %c0_4] : memref<1x1x256xi32, #tpu.memory_space<vmem>>, vector<1x1x256xi32>
    %3 = vector.shape_cast %2 : vector<1x1x256xi32> to vector<1x256xi32>
    %4 = tpu.iota {dimensions = array<i32: 1>} : vector<1x256xi32>
    %c256_i32 = arith.constant 256 : i32
    %5 = arith.muli %arg1, %c256_i32 : i32
    %6 = vector.broadcast %5 : i32 to vector<1x256xi32>
    %7 = arith.addi %6, %4 : vector<1x256xi32>
    %c256_i32_5 = arith.constant 256 : i32
    %8 = vector.broadcast %c256_i32_5 : i32 to vector<1x256xi32>
    %9 = arith.cmpi slt, %7, %8 : vector<1x256xi32>
    %c255_i32 = arith.constant 255 : i32
    %10 = vector.broadcast %c255_i32 : i32 to vector<1x256xi32>
    %11 = arith.cmpi ne, %3, %10 : vector<1x256xi32>
    %12 = arith.andi %11, %9 : vector<1x256xi1>
    %c0_i32 = arith.constant 0 : i32
    %13 = vector.broadcast %c0_i32 : i32 to vector<1x256xi32>
    %14 = arith.select %12, %3, %13 : vector<1x256xi1>, vector<1x256xi32>
    %cst = arith.constant dense<0xFF800000> : vector<256xf32>
    %15 = vector.multi_reduction <maximumf>, %1, %cst [0] : vector<4x256xf32> to vector<256xf32>
    %16 = vector.shape_cast %15 : vector<256xf32> to vector<1x256xf32>
    %17 = vector.broadcast %16 : vector<1x256xf32> to vector<4x256xf32>
    %18 = arith.subf %1, %17 : vector<4x256xf32>
    %19 = math.exp %18 : vector<4x256xf32>
    %cst_6 = arith.constant dense<0.000000e+00> : vector<256xf32>
    %20 = vector.multi_reduction <add>, %19, %cst_6 [0] : vector<4x256xf32> to vector<256xf32>
    %21 = vector.shape_cast %20 : vector<256xf32> to vector<1x256xf32>
    %22 = math.log %21 : vector<1x256xf32>
    %23 = arith.addf %16, %22 : vector<1x256xf32>
    %24 = tpu.iota {dimensions = array<i32: 0>} : vector<4x256xi32>
    %25 = vector.broadcast %14 : vector<1x256xi32> to vector<4x256xi32>
    %26 = arith.cmpi eq, %24, %25 : vector<4x256xi32>
    %cst_7 = arith.constant 0.000000e+00 : f32
    %27 = vector.broadcast %cst_7 : f32 to vector<4x256xf32>
    %28 = arith.select %26, %1, %27 : vector<4x256xi1>, vector<4x256xf32>
    %cst_8 = arith.constant dense<0.000000e+00> : vector<256xf32>
    %29 = vector.multi_reduction <add>, %28, %cst_8 [0] : vector<4x256xf32> to vector<256xf32>
    %30 = vector.shape_cast %29 : vector<256xf32> to vector<1x256xf32>
    %31 = arith.subf %23, %30 : vector<1x256xf32>
    %cst_9 = arith.constant 0.000000e+00 : f32
    %32 = vector.broadcast %cst_9 : f32 to vector<1x256xf32>
    %33 = arith.select %12, %31, %32 : vector<1x256xi1>, vector<1x256xf32>
    %c0_10 = arith.constant 0 : index
    %c0_11 = arith.constant 0 : index
    %c0_12 = arith.constant 0 : index
    %34 = vector.load %arg4[%c0_10, %c0_11, %c0_12] : memref<1x1x256xf32, #tpu.memory_space<vmem>>, vector<1x1x256xf32>
    %35 = vector.shape_cast %34 : vector<1x1x256xf32> to vector<1x256xf32>
    %36 = vector.shape_cast %33 : vector<1x256xf32> to vector<1x1x256xf32>
    tpu.vector_store %arg4[%c0_10, %c0_11, %c0_12], %36 {strides = array<i32>} : memref<1x1x256xf32, #tpu.memory_space<vmem>>, vector<1x1x256xf32>,
    %cst_13 = arith.constant 0.356674939 : f32
    %37 = vector.broadcast %cst_13 : f32 to vector<1x256xf32>
    %38 = arith.cmpf ogt, %33, %37 : vector<1x256xf32>
    %39 = arith.extui %12 : vector<1x256xi1> to vector<1x256xi32>
    %40 = arith.sitofp %39 : vector<1x256xi32> to vector<1x256xf32>
    %41 = vector.shape_cast %40 : vector<1x256xf32> to vector<1x1x256xf32>
    %cst_14 = arith.constant dense<0.000000e+00> : vector<1xf32>
    %42 = vector.multi_reduction <add>, %41, %cst_14 [1, 2] : vector<1x1x256xf32> to vector<1xf32>
    %43 = vector.shape_cast %42 : vector<1xf32> to vector<1x1x1xf32>
    %44 = vector.extract %43[0, 0, 0] : f32 from vector<1x1x1xf32>
    %45 = arith.extui %38 : vector<1x256xi1> to vector<1x256xi32>
    %46 = arith.sitofp %45 : vector<1x256xi32> to vector<1x256xf32>
    %47 = vector.shape_cast %46 : vector<1x256xf32> to vector<1x1x256xf32>
    %cst_15 = arith.constant dense<0.000000e+00> : vector<1xf32>
    %48 = vector.multi_reduction <add>, %47, %cst_15 [1, 2] : vector<1x1x256xf32> to vector<1xf32>
    %49 = vector.shape_cast %48 : vector<1xf32> to vector<1x1x1xf32>
    %50 = vector.extract %49[0, 0, 0] : f32 from vector<1x1x1xf32>
    %cst_16 = arith.constant 0.000000e+00 : f32
    %51 = vector.broadcast %cst_16 : f32 to vector<1x256xf32>
    %52 = arith.select %38, %33, %51 : vector<1x256xi1>, vector<1x256xf32>
    %53 = vector.shape_cast %52 : vector<1x256xf32> to vector<1x1x256xf32>
    %cst_17 = arith.constant dense<0.000000e+00> : vector<1xf32>
    %54 = vector.multi_reduction <add>, %53, %cst_17 [1, 2] : vector<1x1x256xf32> to vector<1xf32>
    %55 = vector.shape_cast %54 : vector<1xf32> to vector<1x1x1xf32>
    %56 = vector.extract %55[0, 0, 0] : f32 from vector<1x1x1xf32>
    %57 = tpu.iota {dimensions = array<i32: 0>} : vector<8x128xi32>
    %58 = tpu.iota {dimensions = array<i32: 1>} : vector<8x128xi32>
    %c0_i32_18 = arith.constant 0 : i32
    %59 = vector.broadcast %c0_i32_18 : i32 to vector<8x128xi32>
    %60 = arith.cmpi eq, %58, %59 : vector<8x128xi32>
    %c0_i32_19 = arith.constant 0 : i32
    %61 = vector.broadcast %c0_i32_19 : i32 to vector<8x128xi32>
    %62 = arith.cmpi eq, %57, %61 : vector<8x128xi32>
    %63 = arith.andi %60, %62 : vector<8x128xi1>
    %c1_i32 = arith.constant 1 : i32
    %64 = vector.broadcast %c1_i32 : i32 to vector<8x128xi32>
    %65 = arith.cmpi eq, %57, %64 : vector<8x128xi32>
    %66 = arith.andi %60, %65 : vector<8x128xi1>
    %c2_i32 = arith.constant 2 : i32
    %67 = vector.broadcast %c2_i32 : i32 to vector<8x128xi32>
    %68 = arith.cmpi eq, %57, %67 : vector<8x128xi32>
    %69 = arith.andi %60, %68 : vector<8x128xi1>
    %cst_20 = arith.constant 0.000000e+00 : f32
    %70 = vector.broadcast %56 : f32 to vector<8x128xf32>
    %71 = vector.broadcast %cst_20 : f32 to vector<8x128xf32>
    %72 = arith.select %69, %70, %71 : vector<8x128xi1>, vector<8x128xf32>
    %73 = vector.broadcast %50 : f32 to vector<8x128xf32>
    %74 = arith.select %66, %73, %72 : vector<8x128xi1>, vector<8x128xf32>
    %75 = vector.broadcast %44 : f32 to vector<8x128xf32>
    %76 = arith.select %63, %75, %74 : vector<8x128xi1>, vector<8x128xf32>
    %c0_21 = arith.constant 0 : index
    %c0_22 = arith.constant 0 : index
    %c0_23 = arith.constant 0 : index
    %c0_24 = arith.constant 0 : index
    %77 = vector.load %arg5[%c0_21, %c0_22, %c0_23, %c0_24] : memref<1x1x8x128xf32, #tpu.memory_space<vmem>>, vector<1x1x8x128xf32>
    %78 = vector.shape_cast %77 : vector<1x1x8x128xf32> to vector<8x128xf32>
    %79 = vector.shape_cast %76 : vector<8x128xf32> to vector<1x1x8x128xf32>
    tpu.vector_store %arg5[%c0_21, %c0_22, %c0_23, %c0_24], %79 {strides = array<i32>} : memref<1x1x8x128xf32, #tpu.memory_space<vmem>>, vector<1x1x8x128xf32>,
    return
  }
  func.func @transform_0(%arg0: i32, %arg1: i32) -> (i32, i32, i32) {
    %c0_i32 = arith.constant 0 : i32
    %c0_i32_0 = arith.constant 0 : i32
    return %arg0, %c0_i32, %arg1 : i32, i32, i32
  }
  func.func @transform_1(%arg0: i32, %arg1: i32) -> (i32, i32, i32) {
    %c0_i32 = arith.constant 0 : i32
    %c0_i32_0 = arith.constant 0 : i32
    return %arg0, %c0_i32, %arg1 : i32, i32, i32
  }
  func.func @transform_2(%arg0: i32, %arg1: i32) -> (i32, i32, i32) {
    %c0_i32 = arith.constant 0 : i32
    %c0_i32_0 = arith.constant 0 : i32
    return %arg0, %c0_i32, %arg1 : i32, i32, i32
  }
  func.func @transform_3(%arg0: i32, %arg1: i32) -> (i32, i32, i32, i32) {
    %c0_i32 = arith.constant 0 : i32
    %c0_i32_0 = arith.constant 0 : i32
    %c0_i32_1 = arith.constant 0 : i32
    return %arg0, %arg1, %c0_i32, %c0_i32_0 : i32, i32, i32, i32
  }
}

</mosaic_0001>

<llo_original>
// kernel: tpu_custom_call.1
$region0: #{tpu_custom_call.1}
  #allocation0 [shape = 'u32[]', space=smem, size = 0x4, offset = 0x4, fixed_abs, tag = 'smem constant byte address 0x4 - core index']
  #allocation1 [shape = 'u32[144,128]{1,0:T(1,128)}', space=vmem, size = 0x12000, scoped, tag = 'internal scratch']
  %s0 = inlined_call_operand.hbm [shape: f32[2,4,256], index: 0, kind: input, shape index: {}]
  %s1 = inlined_call_operand.hbm [shape: s32[2,1,256], index: 1, kind: input, shape index: {}]
  %s2 = inlined_call_operand.hbm [shape: f32[2,1,256], index: 2, kind: output, shape index: {0}]
  %s3 = inlined_call_operand.hbm [shape: f32[2,1,8,128], index: 3, kind: output, shape index: {1}]
  %4 = xla_tuple %s2, %s3
  %s5 = sld [smem:[#allocation0]]
  $region57: #{tpu_custom_call.1} parent=0
    _
  %s7 = ssub.s32 1, %s5
  %s8 = scalar_select 0, %s7, %s5
  $region1: #{tpu_custom_call.1} parent=0
    #allocation2 [shape = 'u8[8192]{0}', space=vmem, size = 0x2000, scoped, tag = 'input window, operand 0']
    #allocation3 [shape = 's32[2]{0}', space=sflag, size = 0x8, scoped, tag = 'scoped memory for tpu_custom_call.1']
    #allocation4 [shape = 's32[2]{0}', space=sflag, size = 0x8, scoped, tag = 'scoped memory for tpu_custom_call.1']
    #allocation5 [shape = 'u8[2048]{0}', space=vmem, size = 0x800, scoped, tag = 'input window, operand 1']
    #allocation6 [shape = 's32[2]{0}', space=sflag, size = 0x8, scoped, tag = 'scoped memory for tpu_custom_call.1']
    #allocation7 [shape = 'u8[2048]{0}', space=vmem, size = 0x800, scoped, tag = 'output window, operand 0']
    #allocation8 [shape = 'u8[8192]{0}', space=vmem, size = 0x2000, scoped, tag = 'output window, operand 1']
    #allocation9 [shape = 's32[2]{0}', space=sflag, size = 0x8, scoped, tag = 'scoped memory for tpu_custom_call.1']
    %9 = vsyncpa [#allocation3], 0
    %s10 = scalar_lea.sflag [#allocation3], 1
    %11 = vsyncpa %s10, 0
    %12 = vsyncpa [#allocation6], 0
    %s13 = scalar_lea.sflag [#allocation6], 1
    %14 = vsyncpa %s13, 0
    %15 = vsyncpa [#allocation4], 0
    %s16 = scalar_lea.sflag [#allocation4], 1
    %17 = vsyncpa %s16, 0
    %18 = vsyncpa [#allocation9], 0
    %s19 = scalar_lea.sflag [#allocation9], 1
    %20 = vsyncpa %s19, 0
    loop: start=0, step=1, limit=4
    $region2: #{tpu_custom_call.1} parent=1 // loop_pre_header
      _
    $region3: #{tpu_custom_call.1} parent=1 // loop_header
      %s22 = sphi 0, %s26
      %p23 = scmp.ge.s32.totalorder %s22, 4
      %s29 = sphi 0, %s41
      %s30 = sphi 0, %s37
      %s31 = sphi 0, %s29
      %s32 = sphi 0, %s30
      %s33 = sphi 0, %s31
      %s34 = sphi 0, %s32
      %s46 = sphi 0, %s48
      %s49 = sphi 0, %s46
      %s50 = sphi 0, %s49
      %s66 = sphi 0, %s50
      %s74 = sphi 0, %s76
      %s77 = sphi 0, %s74
      %s78 = sphi 0, %s77
      %s94 = sphi 0, %s78
      %s102 = sphi 0, %s104
      %s105 = sphi 0, %s102
      %s106 = sphi 0, %s105
      %s122 = sphi 0, %s106
      %s130 = sphi 0, %s132
      %s133 = sphi 0, %s130
      %s134 = sphi 0, %s133
      %s150 = sphi 0, %s134
    $region4: #{tpu_custom_call.1} parent=1 // loop_header_branch
      %25 = sbr.rel (%p23) target = $region8
    $region5: #{tpu_custom_call.1} parent=1 // loop_body
      %s27 = ssub.s32 %s22, 1
      %s28 = ssub.s32 %s22, 2
      %s35 = sadd.s32 1, %s30
      %p36 = scmp.ge.s32.totalorder %s35, 1
      %s37 = scalar_select %p36, 0, %s35
      %s38 = sadd.s32 1, %s29
      %s39 = scalar_select %p36, %s38, %s29
      %p40 = scmp.ge.s32.totalorder %s39, 2
      %s41 = scalar_select %p40, 0, %s39
      %s42 = ssub.s32 %s29, %s41
      %s43 = ssub.s32 %s30, %s37
      %s44 = sor.u32 %s42, %s43
      %p45 = scmp.eq.s32.totalorder %s44, 0
      %s47 = sadd.s32 %s46, 1
      %s48 = scalar_select %p45, %s46, %s47
      %p51 = pneg %p45
      %p52 = scmp.eq.s32.totalorder %s22, 1
      %p53 = por %p51, %p52
      %p54 = scmp.ne.s32.totalorder %s46, %s49
      %p55 = scmp.eq.s32.totalorder %s22, 0
      %p56 = por %p54, %p55
      %p57 = scmp.ne.s32.totalorder %s46, %s49
      %p58 = scmp.eq.s32.totalorder %s27, 1
      %p59 = por %p57, %p58
      %p60 = scmp.ne.s32.totalorder %s49, %s50
      %p61 = scmp.eq.s32.totalorder %s27, 0
      %p62 = por %p60, %p61
      %p63 = scmp.ne.s32.totalorder %s49, %s50
      %p64 = scmp.eq.s32.totalorder %s28, 1
      %p65 = por %p63, %p64
      %p67 = scmp.ne.s32.totalorder %s50, %s66
      %p68 = scmp.eq.s32.totalorder %s28, 0
      %p69 = por %p67, %p68
      %s70 = ssub.s32 %s29, %s41
      %s71 = ssub.s32 %s30, %s37
      %s72 = sor.u32 %s70, %s71
      %p73 = scmp.eq.s32.totalorder %s72, 0
      %s75 = sadd.s32 %s74, 1
      %s76 = scalar_select %p73, %s74, %s75
      %p79 = pneg %p73
      %p80 = scmp.eq.s32.totalorder %s22, 1
      %p81 = por %p79, %p80
      %p82 = scmp.ne.s32.totalorder %s74, %s77
      %p83 = scmp.eq.s32.totalorder %s22, 0
      %p84 = por %p82, %p83
      %p85 = scmp.ne.s32.totalorder %s74, %s77
      %p86 = scmp.eq.s32.totalorder %s27, 1
      %p87 = por %p85, %p86
      %p88 = scmp.ne.s32.totalorder %s77, %s78
      %p89 = scmp.eq.s32.totalorder %s27, 0
      %p90 = por %p88, %p89
      %p91 = scmp.ne.s32.totalorder %s77, %s78
      %p92 = scmp.eq.s32.totalorder %s28, 1
      %p93 = por %p91, %p92
      %p95 = scmp.ne.s32.totalorder %s78, %s94
      %p96 = scmp.eq.s32.totalorder %s28, 0
      %p97 = por %p95, %p96
      %s98 = ssub.s32 %s29, %s41
      %s99 = ssub.s32 %s30, %s37
      %s100 = sor.u32 %s98, %s99
      %p101 = scmp.eq.s32.totalorder %s100, 0
      %s103 = sadd.s32 %s102, 1
      %s104 = scalar_select %p101, %s102, %s103
      %p107 = pneg %p101
      %p108 = scmp.eq.s32.totalorder %s22, 1
      %p109 = por %p107, %p108
      %p110 = scmp.ne.s32.totalorder %s102, %s105
      %p111 = scmp.eq.s32.totalorder %s22, 0
      %p112 = por %p110, %p111
      %p113 = scmp.ne.s32.totalorder %s102, %s105
      %p114 = scmp.eq.s32.totalorder %s27, 1
      %p115 = por %p113, %p114
      %p116 = scmp.ne.s32.totalorder %s105, %s106
      %p117 = scmp.eq.s32.totalorder %s27, 0
      %p118 = por %p116, %p117
      %p119 = scmp.ne.s32.totalorder %s105, %s106
      %p120 = scmp.eq.s32.totalorder %s28, 1
      %p121 = por %p119, %p120
      %p123 = scmp.ne.s32.totalorder %s106, %s122
      %p124 = scmp.eq.s32.totalorder %s28, 0
      %p125 = por %p123, %p124
      %s126 = ssub.s32 %s29, %s41
      %s127 = ssub.s32 %s30, %s37
      %s128 = sor.u32 %s126, %s127
      %p129 = scmp.eq.s32.totalorder %s128, 0
      %s131 = sadd.s32 %s130, 1
      %s132 = scalar_select %p129, %s130, %s131
      %p135 = pneg %p129
      %p136 = scmp.eq.s32.totalorder %s22, 1
      %p137 = por %p135, %p136
      %p138 = scmp.ne.s32.totalorder %s130, %s133
      %p139 = scmp.eq.s32.totalorder %s22, 0
      %p140 = por %p138, %p139
      %p141 = scmp.ne.s32.totalorder %s130, %s133
      %p142 = scmp.eq.s32.totalorder %s27, 1
      %p143 = por %p141, %p142
      %p144 = scmp.ne.s32.totalorder %s133, %s134
      %p145 = scmp.eq.s32.totalorder %s27, 0
      %p146 = por %p144, %p145
      %p147 = scmp.ne.s32.totalorder %s133, %s134
      %p148 = scmp.eq.s32.totalorder %s28, 1
      %p149 = por %p147, %p148
      %p151 = scmp.ne.s32.totalorder %s134, %s150
      %p152 = scmp.eq.s32.totalorder %s28, 0
      %p153 = por %p151, %p152
      %p154 = scmp.le.s32.totalorder 1, %s22
      %p155 = scmp.lt.s32.totalorder %s22, 3
      %p156 = pnand %p154, %p155
      %p157 = pneg %p156
      // Predicated region
      $region9: #{tpu_custom_call.1} parent=5 // pred_check
        _
      $region10: #{tpu_custom_call.1} parent=5 // pred_check_branch
        %159 = sbr.rel (%p156) target = $region12
      $region11: #{tpu_custom_call.1} parent=5 // pred_region
        %s160 = ssub.s32 %s22, 1
      $region12: #{tpu_custom_call.1} parent=5 // pred_fallthru
        _
      %p161 = scmp.lt.s32.totalorder %s22, 2
      // Predicated region
      $region13: #{tpu_custom_call.1} parent=5 // pred_check
        %p162 = pneg %p161
      $region14: #{tpu_custom_call.1} parent=5 // pred_check_branch
        %164 = sbr.rel (%p162) target = $region16
      $region15: #{tpu_custom_call.1} parent=5 // pred_region
        // Predicated region
        $region17: #{tpu_custom_call.1} parent=15 // pred_check
          %p165 = pneg %p56
        $region18: #{tpu_custom_call.1} parent=15 // pred_check_branch
          %167 = sbr.rel (%p165) target = $region20
        $region19: #{tpu_custom_call.1} parent=15 // pred_region
          %s168 = sand.u32 %s46, 1
          %s169 = scalar_lea.sflag [#allocation3], %s168
          %s170 = sand.u32 %s46, 1
          %s171 = smul.addr %s170, 8
          %s172 = scalar_lea.vmem [#allocation2], %s171
          %s173 = smul.u32 2, %s30
          %s175 = ssub.s32 128, 128
          %176 = vsyncadd %s169, %s175
          %s177 = smul.addr %s29, 2
          %s178 = sadd.s32 %s173, %s177
          %s179 = smul.addr %s178, 64
          %s180 = scalar_lea.hbm %s0, %s179
          %s182 = sshll.u32 %s172, 4
          %s183 = int_to_ptr.vmem [resolvable:$true] %s182
          %185 = dma.hbm_to_vmem [thread:$0]  %s180, 128, %s183, %s169
        $region20: #{tpu_custom_call.1} parent=15 // pred_fallthru
          _
        // Predicated region
        $region21: #{tpu_custom_call.1} parent=15 // pred_check
          %p186 = pneg %p84
        $region22: #{tpu_custom_call.1} parent=15 // pred_check_branch
          %188 = sbr.rel (%p186) target = $region24
        $region23: #{tpu_custom_call.1} parent=15 // pred_region
          %s189 = sand.u32 %s74, 1
          %s190 = scalar_lea.sflag [#allocation6], %s189
          %s191 = sand.u32 %s74, 1
          %s192 = smul.addr %s191, 2
          %s193 = scalar_lea.vmem [#allocation5], %s192
          %s194 = smul.u32 2, %s30
          %s196 = ssub.s32 32, 32
          %197 = vsyncadd %s190, %s196
          %s198 = smul.addr %s29, 2
          %s199 = sadd.s32 %s194, %s198
          %s200 = smul.addr %s199, 16
          %s201 = scalar_lea.hbm %s1, %s200
          %s203 = sshll.u32 %s193, 4
          %s204 = int_to_ptr.vmem [resolvable:$true] %s203
          %206 = dma.hbm_to_vmem [thread:$0]  %s201, 32, %s204, %s190
        $region24: #{tpu_custom_call.1} parent=15 // pred_fallthru
          _
      $region16: #{tpu_custom_call.1} parent=5 // pred_fallthru
        _
      %p207 = scmp.le.s32.totalorder 1, %s22
      %p208 = scmp.lt.s32.totalorder %s22, 3
      %p209 = pnand %p207, %p208
      %p210 = pneg %p209
      // Predicated region
      $region25: #{tpu_custom_call.1} parent=5 // pred_check
        _
      $region26: #{tpu_custom_call.1} parent=5 // pred_check_branch
        %212 = sbr.rel (%p209) target = $region28
      $region27: #{tpu_custom_call.1} parent=5 // pred_region
        %s213 = ssub.s32 %s22, 1
        %s214 = sand.u32 %s49, 1
        %s215 = scalar_lea.sflag [#allocation3], %s214
        %s216 = sand.u32 %s49, 1
        %s217 = smul.addr %s216, 8
        %s218 = scalar_lea.vmem [#allocation2], %s217
        // Predicated region
        $region29: #{tpu_custom_call.1} parent=27 // pred_check
          %p219 = pneg %p62
        $region30: #{tpu_custom_call.1} parent=27 // pred_check_branch
          %221 = sbr.rel (%p219) target = $region32
        $region31: #{tpu_custom_call.1} parent=27 // pred_region
          %222 = dma.done %s215, 128
        $region32: #{tpu_custom_call.1} parent=27 // pred_fallthru
          _
        %s223 = sand.u32 %s77, 1
        %s224 = scalar_lea.sflag [#allocation6], %s223
        %s225 = sand.u32 %s77, 1
        %s226 = smul.addr %s225, 2
        %s227 = scalar_lea.vmem [#allocation5], %s226
        // Predicated region
        $region33: #{tpu_custom_call.1} parent=27 // pred_check
          %p228 = pneg %p90
        $region34: #{tpu_custom_call.1} parent=27 // pred_check_branch
          %230 = sbr.rel (%p228) target = $region36
        $region35: #{tpu_custom_call.1} parent=27 // pred_region
          %231 = dma.done %s224, 32
        $region36: #{tpu_custom_call.1} parent=27 // pred_fallthru
          _
        %s232 = sand.u32 %s49, 1
        %s233 = scalar_lea.sflag [#allocation3], %s232
        %s234 = sand.u32 %s49, 1
        %s235 = smul.addr %s234, 8
        %s236 = scalar_lea.vmem [#allocation2], %s235
        %p237 = pneg %p62
        %p238 = pneg %p59
        %s239 = sand.u32 %s77, 1
        %s240 = scalar_lea.sflag [#allocation6], %s239
        %s241 = sand.u32 %s77, 1
        %s242 = smul.addr %s241, 2
        %s243 = scalar_lea.vmem [#allocation5], %s242
        %p244 = pneg %p90
        %p245 = pneg %p87
        %p246 = pneg %p118
        %p247 = pneg %p115
        %s248 = sand.u32 %s105, 1
        %s249 = scalar_lea.sflag [#allocation4], %s248
        %s250 = sand.u32 %s105, 1
        %s251 = smul.addr %s250, 2
        %s252 = scalar_lea.vmem [#allocation7], %s251
        %p253 = pneg %p146
        %p254 = pneg %p143
        %s255 = sand.u32 %s133, 1
        %s256 = scalar_lea.sflag [#allocation9], %s255
        %s257 = sand.u32 %s133, 1
        %s258 = smul.addr %s257, 8
        %s259 = scalar_lea.vmem [#allocation8], %s258
        %s260 = smul.u32 2, %s32
        %s261 = smul.u32 2, %s32
        %s262 = smul.u32 2, %s32
        %v263 = vld [vmem:[%s218] sm:$0xff]
        %v264 = vld [vmem:[%s227] sm:$0x3]
        %v265 = vlaneseq
        %v266 = vand.u32 %v265, 127
        %v267 = vadd.s32 %v266, 128
        %s268 = smul.u32 %s32, 256
        %v269 = vstv %s268
        %v270 = vadd.s32 %v269, %v266
        %v271 = vadd.s32 %v269, %v267
        %vm272 = vcmp.lt.s32.totalorder %v270, 256
        %vm273 = vcmp.lt.s32.totalorder %v271, 256
        %vm274 = vcmp.ne.s32.totalorder %v264, 255
        %v275 = vsel %vm272, 1, 0
        %v276 = vsel %vm273, 1, 0
        %v277 = vcombine.low %v275, %v276
        %v279 = vunpack.c.l.s4 1966171168
        %v280 = vunpack.c.0.s8 %v279
        %v281 = vlaneseq
        %v282 = vshrl.u32 %v281, 7
        %v283 = vsub.s32 %v280, %v282
        %v284 = vrot.slane %v277, %v283
        %v286 = vunpack.c.l.s4 1966171168
        %v287 = vunpack.c.0.s8 %v286
        %v288 = vlaneseq
        %v289 = vshrl.u32 %v288, 7
        %v290 = vsub.s32 %v287, %v289
        %v291 = vrot.slane %v284, %v290
        %vm292 = vcmp.ne.s32.totalorder %v291, 0
        %vm293 = vmand %vm274, %vm292
        %v294 = vsel %vm293, %v264, 0
        %v296 = vcombine.high %v263, %v263
        %vm298 = vcmask 1043456
        %v299 = vsel %vm298, %v263, -inf
        %v300 = vrot.slane %v299, 4
        %v301 = vmax.f32 %v299, %v300
        %v302 = vrot.slane %v301, 2
        %v303 = vmax.f32 %v301, %v302
        %v304 = vrot.slane %v303, 1
        %v305 = vmax.f32 %v303, %v304
        %v306 = vsel %vm298, %v296, -inf
        %v307 = vrot.slane %v306, 4
        %v308 = vmax.f32 %v306, %v307
        %v309 = vrot.slane %v308, 2
        %v310 = vmax.f32 %v308, %v309
        %v311 = vrot.slane %v310, 1
        %v312 = vmax.f32 %v310, %v311
        %v315 = vcombine.low %v305, %v312
        %v317 = vsub.f32 %v263, %v315
        %v318 = vmul.f32 %v317, 1.442695
        %v319 = vpow.pop %v318
        %v321 = vcombine.high %v319, %v319
        %v323 = vsel %vm298, %v319, 0.0
        %v324 = vrot.slane %v323, 4
        %v325 = vadd.f32 %v323, %v324
        %v326 = vrot.slane %v325, 2
        %v327 = vadd.f32 %v325, %v326
        %v328 = vrot.slane %v327, 1
        %v329 = vadd.f32 %v327, %v328
        %v330 = vsel %vm298, %v321, 0.0
        %v331 = vrot.slane %v330, 4
        %v332 = vadd.f32 %v330, %v331
        %v333 = vrot.slane %v332, 2
        %v334 = vadd.f32 %v332, %v333
        %v335 = vrot.slane %v334, 1
        %v336 = vadd.f32 %v334, %v335
        %v337 = vlog2.pop %v329
        %v338 = vmul.f32 %v337, 0.6931472
        %v339 = vlog2.pop %v336
        %v340 = vmul.f32 %v339, 0.6931472
        %v341 = vadd.f32 %v305, %v338
        %v342 = vadd.f32 %v312, %v340
        %v343 = vlaneseq
        %v344 = vshrl.u32 %v343, 7
        %v345 = vlaneseq
        %v346 = vshrl.u32 %v345, 7
        %v347 = vsub.s32 0, %v346
        %v348 = vrot.slane %v294, %v347
        %v349 = vlaneseq
        %v350 = vshrl.u32 %v349, 7
        %v351 = vsub.s32 1, %v350
        %v352 = vrot.slane %v294, %v351
        %vm353 = vcmp.eq.s32.totalorder %v344, %v348
        %vm354 = vcmp.eq.s32.totalorder %v344, %v352
        %v355 = vsel %vm353, %v263, 0.0
        %v356 = vsel %vm354, %v296, 0.0
        %v357 = vsel %vm298, %v355, 0.0
        %v358 = vrot.slane %v357, 4
        %v359 = vadd.f32 %v357, %v358
        %v360 = vrot.slane %v359, 2
        %v361 = vadd.f32 %v359, %v360
        %v362 = vrot.slane %v361, 1
        %v363 = vadd.f32 %v361, %v362
        %v364 = vsel %vm298, %v356, 0.0
        %v365 = vrot.slane %v364, 4
        %v366 = vadd.f32 %v364, %v365
        %v367 = vrot.slane %v366, 2
        %v368 = vadd.f32 %v366, %v367
        %v369 = vrot.slane %v368, 1
        %v370 = vadd.f32 %v368, %v369
        %v371 = vsub.f32 %v341, %v363
        %v372 = vsub.f32 %v342, %v370
        %v375 = vcombine.low %v371, %v372
        %v377 = vunpack.c.l.s4 1966171168
        %v378 = vunpack.c.0.s8 %v377
        %v379 = vlaneseq
        %v380 = vshrl.u32 %v379, 7
        %v381 = vsub.s32 %v378, %v380
        %v382 = vrot.slane %v375, %v381
        %v384 = vunpack.c.l.s4 1966171168
        %v385 = vunpack.c.0.s8 %v384
        %v386 = vlaneseq
        %v387 = vshrl.u32 %v386, 7
        %v388 = vsub.s32 %v385, %v387
        %v389 = vrot.slane %v382, %v388
        %v391 = vsel %vm293, %v389, 0.0
        %v392 = vlaneseq
        %vm393 = vcmp.ge.s32.totalorder %v392, 0
        %vm394 = vcmp.lt.s32.totalorder %v392, 256
        %vm395 = vmand %vm393, %vm394
        %396 = vst.msk [vmem:[%s252] sm:$0x3] %vm395, %v391
        %vm397 = vcmp.gt.f32.partialorder %v391, 0.35667494
        %v398 = vsel %vm293, 1, 0
        %v399 = vcvt.s32.f32 %v398
        %v401 = vlaneseq
        %v402 = vshrl.u32 %v401, 7
        %v403 = vsub.s32 0, %v402
        %v404 = vrot.slane %v399, %v403
        %v405 = vlaneseq
        %v406 = vshrl.u32 %v405, 7
        %v407 = vsub.s32 1, %v406
        %v408 = vrot.slane %v399, %v407
        %vm411 = vcmask 1040384
        %v412 = vsel %vm411, %v404, 0.0
        %v413 = vsel %vm411, %v408, 0.0
        %v414 = vadd.f32 %v412, %v413
        %415 = vadd.xlane.f32.xlu0 %v414
        %v416 = vpop.xlane.xlu0 %415
        %v417 = vrot.slane %v416, 4
        %v418 = vadd.f32 %v416, %v417
        %v419 = vrot.slane %v418, 2
        %v420 = vadd.f32 %v418, %v419
        %v421 = vrot.slane %v420, 1
        %v422 = vadd.f32 %v420, %v421
        %s423 = vtos %v422
        %v424 = vsel %vm397, 1, 0
        %v425 = vcvt.s32.f32 %v424
        %v427 = vlaneseq
        %v428 = vshrl.u32 %v427, 7
        %v429 = vsub.s32 0, %v428
        %v430 = vrot.slane %v425, %v429
        %v431 = vlaneseq
        %v432 = vshrl.u32 %v431, 7
        %v433 = vsub.s32 1, %v432
        %v434 = vrot.slane %v425, %v433
        %v437 = vsel %vm411, %v430, 0.0
        %v438 = vsel %vm411, %v434, 0.0
        %v439 = vadd.f32 %v437, %v438
        %440 = vadd.xlane.f32.xlu0 %v439
        %v441 = vpop.xlane.xlu0 %440
        %v442 = vrot.slane %v441, 4
        %v443 = vadd.f32 %v441, %v442
        %v444 = vrot.slane %v443, 2
        %v445 = vadd.f32 %v443, %v444
        %v446 = vrot.slane %v445, 1
        %v447 = vadd.f32 %v445, %v446
        %s448 = vtos %v447
        %v449 = vsel %vm397, %v391, 0.0
        %v451 = vlaneseq
        %v452 = vshrl.u32 %v451, 7
        %v453 = vsub.s32 0, %v452
        %v454 = vrot.slane %v449, %v453
        %v455 = vlaneseq
        %v456 = vshrl.u32 %v455, 7
        %v457 = vsub.s32 1, %v456
        %v458 = vrot.slane %v449, %v457
        %v461 = vsel %vm411, %v454, 0.0
        %v462 = vsel %vm411, %v458, 0.0
        %v463 = vadd.f32 %v461, %v462
        %464 = vadd.xlane.f32.xlu0 %v463
        %v465 = vpop.xlane.xlu0 %464
        %v466 = vrot.slane %v465, 4
        %v467 = vadd.f32 %v465, %v466
        %v468 = vrot.slane %v467, 2
        %v469 = vadd.f32 %v467, %v468
        %v470 = vrot.slane %v469, 1
        %v471 = vadd.f32 %v469, %v470
        %s472 = vtos %v471
        %vm473 = vcmp.eq.s32.totalorder %v266, 0
        %vm474 = vcmp.eq.s32.totalorder %v344, 0
        %vm475 = vmand %vm473, %vm474
        %vm476 = vcmp.eq.s32.totalorder %v344, 1
        %vm477 = vmand %vm473, %vm476
        %vm478 = vcmp.eq.s32.totalorder %v344, 2
        %vm479 = vmand %vm473, %vm478
        %v480 = vstv %s472
        %v481 = vsel %vm479, %v480, 0.0
        %v482 = vstv %s448
        %v483 = vsel %vm477, %v482, %v481
        %v484 = vstv %s423
        %v485 = vsel %vm475, %v484, %v483
        %486 = vst [vmem:[%s259] sm:$0xff] %v485
        %s487 = sand.u32 %s105, 1
        %s488 = scalar_lea.sflag [#allocation4], %s487
        %s489 = sand.u32 %s105, 1
        %s490 = smul.addr %s489, 2
        %s491 = scalar_lea.vmem [#allocation7], %s490
        %s492 = sand.u32 %s133, 1
        %s493 = scalar_lea.sflag [#allocation9], %s492
        %s494 = sand.u32 %s133, 1
        %s495 = smul.addr %s494, 8
        %s496 = scalar_lea.vmem [#allocation8], %s495
        // Predicated region
        $region37: #{tpu_custom_call.1} parent=27 // pred_check
          %p497 = pneg %p115
        $region38: #{tpu_custom_call.1} parent=27 // pred_check_branch
          %499 = sbr.rel (%p497) target = $region40
        $region39: #{tpu_custom_call.1} parent=27 // pred_region
          %s500 = smul.u32 2, %s32
          %s502 = ssub.s32 32, 32
          %503 = vsyncadd %s488, %s502
          %s504 = smul.addr %s31, 2
          %s505 = sadd.s32 %s500, %s504
          %s506 = smul.addr %s505, 16
          %s507 = scalar_lea.hbm %s2, %s506
          %s509 = sshll.u32 %s491, 4
          %s510 = int_to_ptr.vmem [resolvable:$true] %s509
          %512 = dma.vmem_to_hbm [thread:$0]  %s510, 32, %s507, %s488
        $region40: #{tpu_custom_call.1} parent=27 // pred_fallthru
          _
        // Predicated region
        $region41: #{tpu_custom_call.1} parent=27 // pred_check
          %p513 = pneg %p143
        $region42: #{tpu_custom_call.1} parent=27 // pred_check_branch
          %515 = sbr.rel (%p513) target = $region44
        $region43: #{tpu_custom_call.1} parent=27 // pred_region
          %s517 = ssub.s32 128, 128
          %518 = vsyncadd %s493, %s517
          %s519 = sadd.s32 %s32, %s31
          %s520 = smul.addr %s519, 128
          %s521 = scalar_lea.hbm %s3, %s520
          %s523 = sshll.u32 %s496, 4
          %s524 = int_to_ptr.vmem [resolvable:$true] %s523
          %526 = dma.vmem_to_hbm [thread:$0]  %s524, 128, %s521, %s493
        $region44: #{tpu_custom_call.1} parent=27 // pred_fallthru
          _
      $region28: #{tpu_custom_call.1} parent=5 // pred_fallthru
        _
      %p527 = scmp.le.s32.totalorder 2, %s22
      // Predicated region
      $region45: #{tpu_custom_call.1} parent=5 // pred_check
        %p528 = pneg %p527
      $region46: #{tpu_custom_call.1} parent=5 // pred_check_branch
        %530 = sbr.rel (%p528) target = $region48
      $region47: #{tpu_custom_call.1} parent=5 // pred_region
        %s531 = ssub.s32 %s22, 2
        // Predicated region
        $region49: #{tpu_custom_call.1} parent=47 // pred_check
          %p532 = pneg %p121
        $region50: #{tpu_custom_call.1} parent=47 // pred_check_branch
          %534 = sbr.rel (%p532) target = $region52
        $region51: #{tpu_custom_call.1} parent=47 // pred_region
          %s535 = sand.u32 %s106, 1
          %s536 = scalar_lea.sflag [#allocation4], %s535
          %s537 = sand.u32 %s106, 1
          %s538 = smul.addr %s537, 2
          %s539 = scalar_lea.vmem [#allocation7], %s538
          %540 = dma.done %s536, 32
        $region52: #{tpu_custom_call.1} parent=47 // pred_fallthru
          _
        // Predicated region
        $region53: #{tpu_custom_call.1} parent=47 // pred_check
          %p541 = pneg %p149
        $region54: #{tpu_custom_call.1} parent=47 // pred_check_branch
          %543 = sbr.rel (%p541) target = $region56
        $region55: #{tpu_custom_call.1} parent=47 // pred_region
          %s544 = sand.u32 %s134, 1
          %s545 = scalar_lea.sflag [#allocation9], %s544
          %s546 = sand.u32 %s134, 1
          %s547 = smul.addr %s546, 8
          %s548 = scalar_lea.vmem [#allocation8], %s547
          %549 = dma.done %s545, 128
        $region56: #{tpu_custom_call.1} parent=47 // pred_fallthru
          _
      $region48: #{tpu_custom_call.1} parent=5 // pred_fallthru
        _
    $region6: #{tpu_custom_call.1} parent=1 // loop_footer
      %s26 = sadd.s32 1, %s22
    $region7: #{tpu_custom_call.1} parent=1 // loop_footer_branch
      %21 = sbr.rel target = $region3
    $region8: #{tpu_custom_call.1} parent=1 // loop_exit
      _
    %550 = vsyncpa [#allocation3], 1
    %s551 = scalar_lea.sflag [#allocation3], 1
    %552 = vsyncpa %s551, 1
    %553 = vsyncpa [#allocation6], 1
    %s554 = scalar_lea.sflag [#allocation6], 1
    %555 = vsyncpa %s554, 1
    %556 = vsyncpa [#allocation4], 1
    %s557 = scalar_lea.sflag [#allocation4], 1
    %558 = vsyncpa %s557, 1
    %559 = vsyncpa [#allocation9], 1
    %s560 = scalar_lea.sflag [#allocation9], 1
    %561 = vsyncpa %s560, 1

</llo_original>
